<compile_context>
chip_gen: v7x
topology: tpu7x:2x2x1
jax: 0.10.0
libtpu: 0.0.40
codegen_flags: <defaults>
</compile_context>

<pallas_src>
import jax
import jax.numpy as jnp
from jax.experimental import pallas as pl
from jax.experimental.pallas import tpu as pltpu


_NEG_BIG = -1e30   # effectively -inf for padded classes, NaN-safe in f32 (and bf16).
_SUB_F32 = 8       # f32 sublane rows per vreg


def _round_up(x, m):
    return ((x + m - 1) // m) * m


def action_network_kernel(h_ref, w_ref, b_ref, o_ref):
    """One batch tile: logits = h @ W_t + b, then log_softmax over classes."""
    # f32 -> bf16 cast on the VPU; W is already (K, N) lane-dense and resident.
    h = h_ref[...].astype(w_ref.dtype)
    logits = jnp.dot(h, w_ref[...], preferred_element_type=jnp.float32) + b_ref[...]

    # Numerically stable log_softmax along the class (lane) axis.
    m = jnp.max(logits, axis=-1, keepdims=True)
    shifted = logits - m
    lse = jnp.log(jnp.sum(jnp.exp(shifted), axis=-1, keepdims=True))
    o_ref[...] = (shifted - lse).astype(o_ref.dtype)   # lane-dense (tb, o_pad) store


def prepare_action_network_params(weight, bias, compute_dtype=jnp.bfloat16):
    """One-time layout work (parameter-init time, NOT per step).

    * transposes W to the canonical MXU (K, N) feed,
    * pads the class axis to a lane-dense multiple of 128
      (zero weight columns, -1e30 bias so padded classes vanish from the LSE),
    * casts the weight to the MXU operand dtype.

    Note: 128 padding is ideal for the 128x128 MXU (v5e); if output_size ever
    scales toward a vocab-sized head, pad/tile in 256 on v6e/v7x and switch to a
    class-axis grid with an online log-sum-exp.
    """
    output_size, input_size = weight.shape
    o_pad = _round_up(output_size, 128)
    w_t = jnp.pad(weight, ((0, o_pad - output_size), (0, 0))).T   # (input, o_pad)
    w_t = w_t.astype(compute_dtype)
    b_p = jnp.pad(bias.astype(jnp.float32), (0, o_pad - output_size),
                  constant_values=_NEG_BIG).reshape(1, o_pad)
    return {
        "w_t": w_t,                    # (input_size, o_pad)  compute_dtype
        "b": b_p,                      # (1, o_pad)           float32
        "output_size": output_size,
        "input_size": input_size,
    }


def _choose_batch_tile(batch):
    """Pick a batch tile: big enough to amortize the ~0.35us/step overhead,
    small enough that the grid has >= 2 steps when the batch allows it
    (so v7x megacore can split the batch across its two TensorCores)."""
    if batch <= 2 * _SUB_F32:
        # Tiny batch: single full-dim tile (block == full array dim is legal).
        return batch, 1
    tb = min(1024, _round_up(pl.cdiv(batch, 2), _SUB_F32))
    return tb, pl.cdiv(batch, tb)


def action_network(h_t, params, out_dtype=jnp.float32, keep_padded_classes=False):
    """Per-step forward: log_softmax(h_t @ W^T + b, axis=1).

    Args:
      h_t:    (B, input_size) float32 hidden state (no wrapper pad/cast needed).
      params: dict from prepare_action_network_params().
      out_dtype: dtype of the stored log-probs (bf16 halves the dominant
        writeback stream if the consumer tolerates it).
      keep_padded_classes: if True, return the lane-dense (B, o_pad) slab
        (padded columns ~ -1e30) and avoid the lane-sparse 128->output_size slice.
    Returns:
      (B, output_size) log-probabilities (or (B, o_pad) if keep_padded_classes).
    """
    w_t = params["w_t"]
    b_p = params["b"]
    output_size = params["output_size"]
    input_size = params["input_size"]
    o_pad = w_t.shape[1]

    batch = h_t.shape[0]
    tb, n_tiles = _choose_batch_tile(batch)

    out = pl.pallas_call(
        action_network_kernel,
        out_shape=jax.ShapeDtypeStruct((batch, o_pad), out_dtype),
        grid=(n_tiles,),
        in_specs=[
            pl.BlockSpec((tb, input_size), lambda i: (i, 0)),   # h batch tile (f32)
            pl.BlockSpec((input_size, o_pad), lambda i: (0, 0)),  # resident W (K,N)
            pl.BlockSpec((1, o_pad), lambda i: (0, 0)),           # resident bias row
        ],
        out_specs=pl.BlockSpec((tb, o_pad), lambda i: (i, 0)),
        compiler_params=pltpu.CompilerParams(
            # Batch tiles are independent -> megacore (v7x) can split them.
            dimension_semantics=("parallel",),
        ),
    )(h_t, w_t, b_p)

    if keep_padded_classes:
        return out
    # Lane-sparse slice kept outside the kernel; prefer keep_padded_classes=True
    # when the downstream consumer (argmax / NLL gather) can eat the padded slab.
    return out[:, :output_size]


def reference_log_softmax_linear(h_t, weight, bias):
    logits = h_t @ weight.T + bias
    m = jnp.max(logits, axis=1, keepdims=True)
    shifted = logits - m
    return shifted - jnp.log(jnp.sum(jnp.exp(shifted), axis=1, keepdims=True))


if __name__ == "__main__":
    # Small shapes consistent with the module: hidden (input_size)=32, classes=10.
    B, input_size, output_size = 2, 32, 10

    key = jax.random.PRNGKey(0)
    k_h, k_w, k_b = jax.random.split(key, 3)

    h_t = jax.random.normal(k_h, (B, input_size), dtype=jnp.float32)

    # Deterministic init mimicking nn.Linear: U(-1/sqrt(fan_in), 1/sqrt(fan_in))
    bound = 1.0 / jnp.sqrt(jnp.float32(input_size))
    weight = jax.random.uniform(k_w, (output_size, input_size),
                                minval=-bound, maxval=bound, dtype=jnp.float32)
    bias = jax.random.uniform(k_b, (output_size,),
                              minval=-bound, maxval=bound, dtype=jnp.float32)

    # One-time prep: pre-transposed bf16 weight (32, 128), -1e30-padded bias.
    params = prepare_action_network_params(weight, bias)

    out = action_network(h_t, params)
    out = jax.block_until_ready(out)

    ref = reference_log_softmax_linear(h_t, weight, bias)
    assert out.shape == (B, output_size)
    # bf16 operands / f32 accumulation -> loose-but-meaningful tolerance vs f32 ref.
    assert jnp.allclose(out, ref, atol=5e-2, rtol=0.0), \
        float(jnp.max(jnp.abs(out - ref)))
    # Each row must still be a valid log-probability vector (padding masked out).
    assert jnp.allclose(jnp.sum(jnp.exp(out), axis=1), 1.0, atol=1e-3)

    print("KERNEL_OK")
</pallas_src>

<mosaic_0001>
module attributes {stable_mosaic.version = 11 : i64} {
  func.func @action_network_kernel(%arg0: i32, %arg1: memref<2x32xf32, #tpu.memory_space<vmem>>, %arg2: memref<32x128xbf16, #tpu.memory_space<vmem>>, %arg3: memref<1x128xf32, #tpu.memory_space<vmem>>, %arg4: memref<2x128xf32, #tpu.memory_space<vmem>>) attributes {dimension_semantics = [#tpu.dimension_semantics<parallel>], iteration_bounds = array<i64: 1>, scalar_prefetch = 0 : i64, scratch_operands = 0 : i64, tpu.core_type = #tpu.core_type<tc>, window_params = [{transform_indices = @transform_0, window_bounds = array<i64: 2, 32>}, {pipeline_mode = #tpu.pipeline_mode<synchronous>, transform_indices = @transform_1, window_bounds = array<i64: 32, 128>}, {pipeline_mode = #tpu.pipeline_mode<synchronous>, transform_indices = @transform_2, window_bounds = array<i64: 1, 128>}, {transform_indices = @transform_3, window_bounds = array<i64: 2, 128>}]} {
    %c0 = arith.constant 0 : index
    %c0_0 = arith.constant 0 : index
    %0 = vector.load %arg1[%c0, %c0_0] : memref<2x32xf32, #tpu.memory_space<vmem>>, vector<2x32xf32>
    %1 = arith.truncf %0 : vector<2x32xf32> to vector<2x32xbf16>
    %c0_1 = arith.constant 0 : index
    %c0_2 = arith.constant 0 : index
    %2 = vector.load %arg2[%c0_1, %c0_2] : memref<32x128xbf16, #tpu.memory_space<vmem>>, vector<32x128xbf16>
    %cst = arith.constant dense<0.000000e+00> : vector<2x128xf32>
    %3 = tpu.matmul %1, %2, %cst {dimension_numbers = #tpu.dot_dimension_numbers<[1], [0], [0], [1], [0, 0, 1, 1], [], []>} : vector<2x32xbf16>, vector<32x128xbf16>, vector<2x128xf32> -> vector<2x128xf32>
    %c0_3 = arith.constant 0 : index
    %c0_4 = arith.constant 0 : index
    %4 = vector.load %arg3[%c0_3, %c0_4] : memref<1x128xf32, #tpu.memory_space<vmem>>, vector<1x128xf32>
    %5 = vector.broadcast %4 : vector<1x128xf32> to vector<2x128xf32>
    %6 = arith.addf %3, %5 : vector<2x128xf32>
    %cst_5 = arith.constant dense<0xFF800000> : vector<2xf32>
    %7 = vector.multi_reduction <maximumf>, %6, %cst_5 [1] : vector<2x128xf32> to vector<2xf32>
    %8 = vector.shape_cast %7 : vector<2xf32> to vector<2x1xf32>
    %9 = vector.broadcast %8 : vector<2x1xf32> to vector<2x128xf32>
    %10 = arith.subf %6, %9 : vector<2x128xf32>
    %11 = math.exp %10 : vector<2x128xf32>
    %cst_6 = arith.constant dense<0.000000e+00> : vector<2xf32>
    %12 = vector.multi_reduction <add>, %11, %cst_6 [1] : vector<2x128xf32> to vector<2xf32>
    %13 = vector.shape_cast %12 : vector<2xf32> to vector<2x1xf32>
    %14 = math.log %13 : vector<2x1xf32>
    %15 = vector.broadcast %14 : vector<2x1xf32> to vector<2x128xf32>
    %16 = arith.subf %10, %15 : vector<2x128xf32>
    %c0_7 = arith.constant 0 : index
    %c0_8 = arith.constant 0 : index
    %17 = vector.load %arg4[%c0_7, %c0_8] : memref<2x128xf32, #tpu.memory_space<vmem>>, vector<2x128xf32>
    tpu.vector_store %arg4[%c0_7, %c0_8], %16 {strides = array<i32>} : memref<2x128xf32, #tpu.memory_space<vmem>>, vector<2x128xf32>,
    return
  }
  func.func @transform_0(%arg0: i32) -> (i32, i32) {
    %c0_i32 = arith.constant 0 : i32
    %c0_i32_0 = arith.constant 0 : i32
    return %arg0, %c0_i32 : i32, i32
  }
  func.func @transform_1(%arg0: i32) -> (i32, i32) {
    %c0_i32 = arith.constant 0 : i32
    %c0_i32_0 = arith.constant 0 : i32
    %c0_i32_1 = arith.constant 0 : i32
    return %c0_i32, %c0_i32_0 : i32, i32
  }
  func.func @transform_2(%arg0: i32) -> (i32, i32) {
    %c0_i32 = arith.constant 0 : i32
    %c0_i32_0 = arith.constant 0 : i32
    %c0_i32_1 = arith.constant 0 : i32
    return %c0_i32, %c0_i32_0 : i32, i32
  }
  func.func @transform_3(%arg0: i32) -> (i32, i32) {
    %c0_i32 = arith.constant 0 : i32
    %c0_i32_0 = arith.constant 0 : i32
    return %arg0, %c0_i32 : i32, i32
  }
}

</mosaic_0001>

<llo_original>
// kernel: tpu_custom_call.1
$region0: #{tpu_custom_call.1}
  #allocation0 [shape = 'u32[]', space=smem, size = 0x4, offset = 0x4, fixed_abs, tag = 'smem constant byte address 0x4 - core index']
  #allocation1 [shape = 'u32[144,128]{1,0:T(1,128)}', space=vmem, size = 0x12000, scoped, tag = 'internal scratch']
  %s0 = inlined_call_operand.hbm [shape: f32[2,32], index: 0, kind: input, shape index: {}]
  %s1 = inlined_call_operand.hbm [shape: bf16[32,128], index: 1, kind: input, shape index: {}]
  %s2 = inlined_call_operand.vmem [shape: f32[1,128], index: 2, kind: input, shape index: {}]
  %s3 = inlined_call_operand.hbm [shape: f32[2,128], index: 3, kind: output, shape index: {}]
  %s4 = sld [smem:[#allocation0]]
  $region30: #{tpu_custom_call.1} parent=0
    _
  %s6 = ssub.s32 1, %s4
  %s7 = scalar_select 0, %s6, %s4
  $region1: #{tpu_custom_call.1} parent=0
    #allocation2 [shape = 'u8[1024]{0}', space=vmem, size = 0x400, scoped, tag = 'input window, operand 0, single buffered']
    #allocation3 [shape = 's32[1]{0}', space=sflag, size = 0x4, scoped, tag = 'scoped memory for tpu_custom_call.1']
    #allocation4 [shape = 's32[1]{0}', space=sflag, size = 0x4, scoped, tag = 'scoped memory for tpu_custom_call.1']
    #allocation5 [shape = 'u8[8192]{0}', space=vmem, size = 0x2000, scoped, tag = 'input window, operand 1, single buffered']
    #allocation6 [shape = 's32[1]{0}', space=sflag, size = 0x4, scoped, tag = 'scoped memory for tpu_custom_call.1']
    #allocation7 [shape = 'u8[1024]{0}', space=vmem, size = 0x400, scoped, tag = 'output window, operand 0, single buffered']
    %8 = vsyncpa [#allocation3], 0
    %9 = vsyncpa [#allocation6], 0
    %10 = vsyncpa [#allocation4], 0
    // Predicated region
    $region2: #{tpu_custom_call.1} parent=1 // pred_check
      _
    $region3: #{tpu_custom_call.1} parent=1 // pred_check_branch
      %12 = sbr.rel (0) target = $region5
    $region4: #{tpu_custom_call.1} parent=1 // pred_region
      %s14 = ssub.s32 32, 32
      %15 = vsyncadd [#allocation3], %s14
      %s17 = sshll.u32 [#allocation2], 4
      %s18 = int_to_ptr.vmem [resolvable:$true] %s17
      %20 = dma.hbm_to_vmem [thread:$0]  %s0, 32, %s18, [#allocation3]
    $region5: #{tpu_custom_call.1} parent=1 // pred_fallthru
      _
    // Predicated region
    $region6: #{tpu_custom_call.1} parent=1 // pred_check
      _
    $region7: #{tpu_custom_call.1} parent=1 // pred_check_branch
      %22 = sbr.rel (0) target = $region9
    $region8: #{tpu_custom_call.1} parent=1 // pred_region
      %s24 = ssub.s32 256, 256
      %25 = vsyncadd [#allocation6], %s24
      %s26 = sshll.u32 [#allocation5], 4
      %s27 = int_to_ptr.vmem [resolvable:$true] %s26
      %32 = dma.hbm_to_vmem [thread:$0]  %s1, 256, %s27, [#allocation6], 64, 64, 4
    $region9: #{tpu_custom_call.1} parent=1 // pred_fallthru
      _
    // Predicated region
    $region10: #{tpu_custom_call.1} parent=1 // pred_check
      _
    $region11: #{tpu_custom_call.1} parent=1 // pred_check_branch
      %34 = sbr.rel (0) target = $region13
    $region12: #{tpu_custom_call.1} parent=1 // pred_region
      _
    $region13: #{tpu_custom_call.1} parent=1 // pred_fallthru
      _
    // Predicated region
    $region14: #{tpu_custom_call.1} parent=1 // pred_check
      _
    $region15: #{tpu_custom_call.1} parent=1 // pred_check_branch
      %36 = sbr.rel (0) target = $region17
    $region16: #{tpu_custom_call.1} parent=1 // pred_region
      %37 = dma.done [#allocation3], 32
    $region17: #{tpu_custom_call.1} parent=1 // pred_fallthru
      _
    // Predicated region
    $region18: #{tpu_custom_call.1} parent=1 // pred_check
      _
    $region19: #{tpu_custom_call.1} parent=1 // pred_check_branch
      %39 = sbr.rel (0) target = $region21
    $region20: #{tpu_custom_call.1} parent=1 // pred_region
      %40 = dma.done [#allocation6], 256
    $region21: #{tpu_custom_call.1} parent=1 // pred_fallthru
      _
    %v42 = vld [vmem:[#allocation2] sm:$0x3]
    %v43 = vpack.c.bf16 %v42, %v42
    %v44 = vld [vmem:[#allocation5] sm:$0xf]
    %v45 = vld [vmem:[#allocation5 + $0x4] sm:$0xf]
    %v46 = vld [vmem:[#allocation5 + $0x8] sm:$0xf]
    %v47 = vld [vmem:[#allocation5 + $0xc] sm:$0xf]
    %v48 = vld [vmem:[%s2] sm:$0x1]
    %v50 = vlaneseq
    %v51 = vshrl.u32 %v50, 7
    %v52 = vsub.s32 0, %v51
    %v53 = vrot.slane %v48, %v52
    %v59 = vunpack.c.l.b16 %v44
    %v60 = vunpack.c.l.b16 %v45
    %v61 = vunpack.c.l.b16 %v46
    %v62 = vunpack.c.l.b16 %v47
    %v63 = vpack.c.b16 %v60, %v59
    %v64 = vpack.c.b16 %v62, %v61
    %vm67 = vcmask 261120
    %v69 = vsel %vm67, %v43, 0
    %71 = vmatprep.subr.bf16.mxu0 0
    %72 = vmatpush1.bf16.msra.mxu0 %v63
    %73 = vmatprep.subr.bf16.mxu0 0
    %74 = vmatpush1.bf16.msra.mxu0 %v64
    %75 = vmatprep.subr.bf16.mxu0 0
    %76 = vmatpush1.bf16.msra.mxu0 0
    %77 = vmatprep.subr.bf16.mxu0 0
    %78 = vmatpush1.bf16.msra.mxu0 0
    %79 = vmatprep.subr.bf16.mxu0 0
    %80 = vmatpush1.bf16.msra.mxu0 0
    %81 = vmatprep.subr.bf16.mxu0 0
    %82 = vmatpush1.bf16.msra.mxu0 0
    %83 = vmatprep.subr.bf16.mxu0 0
    %84 = vmatpush1.bf16.msra.mxu0 0
    %85 = vmatprep.subr.bf16.mxu0 0
    %86 = vmatpush1.bf16.msra.mxu0 0
    %87 = vmatprep.subr.bf16.mxu0 0
    %88 = vmatpush1.bf16.msra.mxu0 0
    %89 = vmatprep.subr.bf16.mxu0 0
    %90 = vmatpush1.bf16.msra.mxu0 0
    %91 = vmatprep.subr.bf16.mxu0 0
    %92 = vmatpush1.bf16.msra.mxu0 0
    %93 = vmatprep.subr.bf16.mxu0 0
    %94 = vmatpush1.bf16.msra.mxu0 0
    %95 = vmatprep.subr.bf16.mxu0 0
    %96 = vmatpush1.bf16.msra.mxu0 0
    %97 = vmatprep.subr.bf16.mxu0 0
    %98 = vmatpush1.bf16.msra.mxu0 0
    %99 = vmatprep.subr.bf16.mxu0 0
    %100 = vmatpush1.bf16.msra.mxu0 0
    %101 = vmatprep.subr.bf16.mxu0 0
    %102 = vmatpush1.bf16.msra.mxu0 0
    %103 = vmatprep.mubr.bf16.mxu0 0
    %104 = vmatmul.mubr.bf16.gmra.mrb[0].mxu0 %v69
    %v105 = vpop.f32.mrb[0].mxu0
    %v106 = vadd.f32 %v53, %v105
    %v107 = vpop.f32.mrb[0].mxu0
    %v108 = vpop.f32.mrb[0].mxu0
    %v109 = vpop.f32.mrb[0].mxu0
    %110 = vdwg.mxu0
    %vm111 = vcmask 1041408
    %v112 = vsel %vm111, %v106, -inf
    %113 = vmax.xlane.f32.xlu0 %v112
    %v114 = vpop.xlane.xlu0 %113
    %v115 = vsub.f32 %v106, %v114
    %v116 = vmul.f32 %v115, 1.442695
    %v117 = vpow.pop %v116
    %v118 = vsel %vm111, %v117, 0.0
    %119 = vadd.xlane.f32.xlu0 %v118
    %v120 = vpop.xlane.xlu0 %119
    %v121 = vlog2.pop %v120
    %v122 = vmul.f32 %v121, 0.6931472
    %v123 = vsub.f32 %v115, %v122
    %124 = vst [vmem:[#allocation7] sm:$0x3] %v123
    // Predicated region
    $region22: #{tpu_custom_call.1} parent=1 // pred_check
      _
    $region23: #{tpu_custom_call.1} parent=1 // pred_check_branch
      %126 = sbr.rel (0) target = $region25
    $region24: #{tpu_custom_call.1} parent=1 // pred_region
      %s128 = ssub.s32 32, 32
      %129 = vsyncadd [#allocation4], %s128
      %s131 = sshll.u32 [#allocation7], 4
      %s132 = int_to_ptr.vmem [resolvable:$true] %s131
      %134 = dma.vmem_to_hbm [thread:$0]  %s132, 32, %s3, [#allocation4]
    $region25: #{tpu_custom_call.1} parent=1 // pred_fallthru
      _
    // Predicated region
    $region26: #{tpu_custom_call.1} parent=1 // pred_check
      _
    $region27: #{tpu_custom_call.1} parent=1 // pred_check_branch
      %136 = sbr.rel (0) target = $region29
    $region28: #{tpu_custom_call.1} parent=1 // pred_region
      %137 = dma.done [#allocation4], 32
    $region29: #{tpu_custom_call.1} parent=1 // pred_fallthru
      _
    %138 = vsyncpa [#allocation3], 1
    %139 = vsyncpa [#allocation6], 1
    %140 = vsyncpa [#allocation4], 1

</llo_original>
